<compile_context>
chip_gen: v5e
topology: v5e:2x2
jax: 0.10.0
libtpu: 0.0.40
codegen_flags: <defaults>
</compile_context>

<pallas_src>
import functools

import jax
import jax.numpy as jnp
import numpy as np
from jax import lax
from jax.experimental import pallas as pl
from jax.experimental.pallas import tpu as pltpu

LANES = 128
_MIB = 1 << 20


def _round_up(x: int, m: int) -> int:
    return ((x + m - 1) // m) * m


def _tpu_generation_defaults():
    """Per-generation tuning: (row-split count, double-buffered input VMEM budget)."""
    try:
        kind = jax.devices()[0].device_kind.lower()
    except Exception:  # pragma: no cover - CPU / unknown backend fallback
        kind = ""
    # 2-way row split only where there are 2 TensorCores per chip (v7x).
    # TODO(synk): verify "parallel" actually shards the leading axis across the
    # two v7x TensorCores; if not, switch to pltpu.CORE_PARALLEL / pl.core_map.
    num_splits = 2 if "v7" in kind else 1
    # Stay comfortably under the default scoped-VMEM limit (16 MiB on v5e,
    # 32 MiB on v6e/v7x) without needing vmem_limit_bytes overrides.
    vmem_budget = 24 * _MIB if ("v6" in kind or "v7" in kind) else 12 * _MIB
    return num_splits, vmem_budget


_NUM_SPLITS, _VMEM_INPUT_BUDGET = _tpu_generation_defaults()


def _masked_sq_and_count(pred, target, mask_raw):
    """Masked squared error sum and mask count with plain jnp (tiny tails only)."""
    m = mask_raw if mask_raw.dtype == jnp.bool_ else (mask_raw != 0)
    d = jnp.where(m, pred.astype(jnp.float32) - target.astype(jnp.float32), 0.0)
    return jnp.sum(d * d), jnp.sum(m.astype(jnp.float32))


def _masked_mse_kernel(pred_ref, target_ref, mask_ref, sumsq_ref, cnt_ref, *,
                       block_rows, blocks_per_split, nblocks, total_rows):
    """Accumulate per-lane masked squared-error sums and mask counts."""
    s = pl.program_id(0)   # split axis ("parallel": one per TensorCore on v7x)
    j = pl.program_id(1)   # row-block axis ("arbitrary": reduction)

    @pl.when(j == 0)
    def _init():
        sumsq_ref[...] = jnp.zeros_like(sumsq_ref)
        cnt_ref[...] = jnp.zeros_like(cnt_ref)

    # Logical (unclamped) block index; block_idx >= nblocks means a clamped
    # duplicate block (odd block count split across cores) -> skip all compute.
    block_idx = s * blocks_per_split + j

    def _load_mask():
        raw = mask_ref[...]
        return raw if raw.dtype == jnp.bool_ else (raw != 0)

    def _accumulate(valid):
        # Select (not multiply-by-mask) so NaN/Inf in masked-out slots or in the
        # unspecified padding of the ragged last block can never leak through.
        d = jnp.where(valid,
                      pred_ref[...].astype(jnp.float32)
                      - target_ref[...].astype(jnp.float32),
                      0.0)
        sumsq_ref[...] += jnp.sum(d * d, axis=0, keepdims=True)[None]
        cnt_ref[...] += jnp.sum(valid.astype(jnp.float32), axis=0,
                                keepdims=True)[None]

    @pl.when(block_idx < nblocks - 1)
    def _interior():
        # Fully in-bounds block: mask-only path, no per-element row-id math.
        _accumulate(_load_mask())

    @pl.when(block_idx == nblocks - 1)
    def _last():
        # Last real block: may be ragged, so also mask out rows past total_rows
        # (Pallas pads the out-of-bounds part of the block with unspecified data).
        row0 = block_idx * block_rows
        row_ids = row0 + lax.broadcasted_iota(jnp.int32, (block_rows, LANES), 0)
        _accumulate(jnp.logical_and(_load_mask(), row_ids < total_rows))


@jax.jit
def masked_mse_loss(pred: jax.Array, target: jax.Array, mask: jax.Array) -> jax.Array:
    """Pallas implementation of MaskedLoss(nn.MSELoss())(pred, target, mask)."""
    n = pred.size
    pred_f = pred.reshape(-1)
    target_f = target.reshape(-1)
    mask_f = mask.reshape(-1)           # native dtype; bool/int8 stay 1 B/elem

    rows = n // LANES                   # full 128-lane rows handled by the kernel
    n_main = rows * LANES               # flat tail (< 128 elems) handled with jnp

    sumsq = jnp.zeros((), jnp.float32)
    cnt = jnp.zeros((), jnp.float32)

    if rows > 0:
        # Zero-copy in the common case (n % 128 == 0: slice is identity, reshape
        # of a contiguous flat array is a bitcast).
        pred2 = pred_f[:n_main].reshape(rows, LANES)
        target2 = target_f[:n_main].reshape(rows, LANES)
        mask2 = mask_f[:n_main].reshape(rows, LANES)

        num_splits = _NUM_SPLITS
        bytes_per_row = LANES * (pred2.dtype.itemsize + target2.dtype.itemsize
                                 + mask2.dtype.itemsize)
        # 2x for double buffering of the three input blocks.
        max_block_rows = _VMEM_INPUT_BUDGET // (2 * bytes_per_row)
        max_block_rows = min(8192, max(512, (max_block_rows // 512) * 512))

        # Pick block_rows so the last block isn't nearly empty and so the block
        # count divides evenly across the (optional) core split.
        min_blocks = num_splits if rows >= num_splits * 1024 else 1
        nblocks_target = max(pl.cdiv(rows, max_block_rows), min_blocks)
        if nblocks_target == 1:
            block_rows = rows                    # full extent: always legal
        else:
            nblocks_target = pl.cdiv(nblocks_target, num_splits) * num_splits
            block_rows = min(_round_up(pl.cdiv(rows, nblocks_target), 256), rows)
        nblocks = pl.cdiv(rows, block_rows)
        num_splits = min(num_splits, nblocks)
        bps = pl.cdiv(nblocks, num_splits)       # blocks per split

        def in_map(s, j):
            # Clamp so DMA windows stay in-bounds; logically-OOB duplicate
            # blocks are skipped inside the kernel.
            return (jnp.minimum(s * bps + j, nblocks - 1), 0)

        data_spec = pl.BlockSpec((block_rows, LANES), in_map)
        out_spec = pl.BlockSpec((1, 1, LANES), lambda s, j: (s, 0, 0))

        kernel = functools.partial(
            _masked_mse_kernel,
            block_rows=block_rows, blocks_per_split=bps,
            nblocks=nblocks, total_rows=rows)

        sumsq_p, cnt_p = pl.pallas_call(
            kernel,
            out_shape=(jax.ShapeDtypeStruct((num_splits, 1, LANES), jnp.float32),
                       jax.ShapeDtypeStruct((num_splits, 1, LANES), jnp.float32)),
            grid_spec=pltpu.PrefetchScalarGridSpec(
                num_scalar_prefetch=0,
                grid=(num_splits, bps),
                in_specs=[data_spec, data_spec, data_spec],
                out_specs=(out_spec, out_spec),
            ),
            compiler_params=pltpu.CompilerParams(
                dimension_semantics=("parallel", "arbitrary"),
            ),
        )(pred2, target2, mask2)

        # Tiny final reduction over <= 2*128 per-lane partials.
        sumsq = sumsq + jnp.sum(sumsq_p)
        cnt = cnt + jnp.sum(cnt_p)

    if n_main < n:
        # Ragged flat tail (< 128 elements): fold in with plain jnp instead of
        # padding/copying the full arrays.
        ts, tc = _masked_sq_and_count(pred_f[n_main:], target_f[n_main:],
                                      mask_f[n_main:])
        sumsq = sumsq + ts
        cnt = cnt + tc

    # All-false mask -> 0/0 = NaN, matching PyTorch MSELoss on an empty selection.
    return sumsq / cnt


if __name__ == "__main__":
    key = jax.random.PRNGKey(0)
    k1, k2, k3 = jax.random.split(key, 3)

    B, C, H, W = 2, 4, 16, 16  # NCHW, like PyTorch
    pred = jax.random.normal(k1, (B, C, H, W), dtype=jnp.float32)
    target = jax.random.normal(k2, (B, C, H, W), dtype=jnp.float32)
    mask = jax.random.bernoulli(k3, p=0.5, shape=(B, C, H, W))  # bool mask

    loss = jax.block_until_ready(masked_mse_loss(pred, target, mask))

    # reference: mean squared error over masked elements (what PyTorch computes)
    m = mask.astype(jnp.float32)
    ref = jnp.sum(m * (pred - target) ** 2) / jnp.sum(m)
    np.testing.assert_allclose(np.asarray(loss), np.asarray(ref), rtol=1e-5, atol=1e-6)

    print("KERNEL_OK")
</pallas_src>

<mosaic_0001>
module attributes {stable_mosaic.version = 11 : i64} {
  func.func @_masked_mse_kernel(%arg0: i32, %arg1: i32, %arg2: memref<16x128xf32, #tpu.memory_space<vmem>>, %arg3: memref<16x128xf32, #tpu.memory_space<vmem>>, %arg4: memref<16x128xi32, #tpu.memory_space<vmem>>, %arg5: memref<1x1x128xf32, #tpu.memory_space<vmem>>, %arg6: memref<1x1x128xf32, #tpu.memory_space<vmem>>) attributes {dimension_semantics = [#tpu.dimension_semantics<parallel>, #tpu.dimension_semantics<arbitrary>], iteration_bounds = array<i64: 1, 1>, scalar_prefetch = 0 : i64, scratch_operands = 0 : i64, tpu.core_type = #tpu.core_type<tc>, window_params = [{transform_indices = @transform_0, window_bounds = array<i64: 16, 128>}, {transform_indices = @transform_1, window_bounds = array<i64: 16, 128>}, {transform_indices = @transform_2, window_bounds = array<i64: 16, 128>}, {transform_indices = @transform_3, window_bounds = array<i64: 1, 1, 128>}, {transform_indices = @transform_4, window_bounds = array<i64: 1, 1, 128>}]} {
    %c0_i32 = arith.constant 0 : i32
    %0 = arith.cmpi eq, %arg1, %c0_i32 : i32
    %1 = arith.extui %0 : i1 to i32
    %c0_i32_0 = arith.constant 0 : i32
    %2 = arith.cmpi ne, %1, %c0_i32_0 : i32
    scf.if %2 {
      %cst = arith.constant 0.000000e+00 : f32
      %11 = vector.broadcast %cst : f32 to vector<1x1x128xf32>
      %c0 = arith.constant 0 : index
      %c0_5 = arith.constant 0 : index
      %c0_6 = arith.constant 0 : index
      %12 = vector.load %arg5[%c0, %c0_5, %c0_6] : memref<1x1x128xf32, #tpu.memory_space<vmem>>, vector<1x1x128xf32>
      tpu.vector_store %arg5[%c0, %c0_5, %c0_6], %11 {strides = array<i32>} : memref<1x1x128xf32, #tpu.memory_space<vmem>>, vector<1x1x128xf32>,
      %cst_7 = arith.constant 0.000000e+00 : f32
      %13 = vector.broadcast %cst_7 : f32 to vector<1x1x128xf32>
      %c0_8 = arith.constant 0 : index
      %c0_9 = arith.constant 0 : index
      %c0_10 = arith.constant 0 : index
      %14 = vector.load %arg6[%c0_8, %c0_9, %c0_10] : memref<1x1x128xf32, #tpu.memory_space<vmem>>, vector<1x1x128xf32>
      tpu.vector_store %arg6[%c0_8, %c0_9, %c0_10], %13 {strides = array<i32>} : memref<1x1x128xf32, #tpu.memory_space<vmem>>, vector<1x1x128xf32>,
    } else {
    }
    %c1_i32 = arith.constant 1 : i32
    %3 = arith.muli %arg0, %c1_i32 : i32
    %4 = arith.addi %3, %arg1 : i32
    %c0_i32_1 = arith.constant 0 : i32
    %5 = arith.cmpi slt, %4, %c0_i32_1 : i32
    %6 = arith.extui %5 : i1 to i32
    %c0_i32_2 = arith.constant 0 : i32
    %7 = arith.cmpi ne, %6, %c0_i32_2 : i32
    scf.if %7 {
      %c0 = arith.constant 0 : index
      %c0_5 = arith.constant 0 : index
      %11 = vector.load %arg4[%c0, %c0_5] : memref<16x128xi32, #tpu.memory_space<vmem>>, vector<16x128xi32>
      %cst = arith.constant dense<0> : vector<16x128xi32>
      %12 = arith.cmpi ne, %11, %cst : vector<16x128xi32>
      %c0_6 = arith.constant 0 : index
      %c0_7 = arith.constant 0 : index
      %13 = vector.load %arg2[%c0_6, %c0_7] : memref<16x128xf32, #tpu.memory_space<vmem>>, vector<16x128xf32>
      %c0_8 = arith.constant 0 : index
      %c0_9 = arith.constant 0 : index
      %14 = vector.load %arg3[%c0_8, %c0_9] : memref<16x128xf32, #tpu.memory_space<vmem>>, vector<16x128xf32>
      %15 = arith.subf %13, %14 : vector<16x128xf32>
      %cst_10 = arith.constant 0.000000e+00 : f32
      %16 = vector.broadcast %cst_10 : f32 to vector<16x128xf32>
      %17 = arith.select %12, %15, %16 : vector<16x128xi1>, vector<16x128xf32>
      %c0_11 = arith.constant 0 : index
      %c0_12 = arith.constant 0 : index
      %c0_13 = arith.constant 0 : index
      %18 = vector.load %arg5[%c0_11, %c0_12, %c0_13] : memref<1x1x128xf32, #tpu.memory_space<vmem>>, vector<1x1x128xf32>
      %19 = arith.mulf %17, %17 : vector<16x128xf32>
      %cst_14 = arith.constant dense<0.000000e+00> : vector<128xf32>
      %20 = vector.multi_reduction <add>, %19, %cst_14 [0] : vector<16x128xf32> to vector<128xf32>
      %21 = vector.shape_cast %20 : vector<128xf32> to vector<1x128xf32>
      %22 = vector.shape_cast %21 : vector<1x128xf32> to vector<1x1x128xf32>
      %23 = arith.addf %18, %22 : vector<1x1x128xf32>
      %c0_15 = arith.constant 0 : index
      %c0_16 = arith.constant 0 : index
      %c0_17 = arith.constant 0 : index
      %24 = vector.load %arg5[%c0_15, %c0_16, %c0_17] : memref<1x1x128xf32, #tpu.memory_space<vmem>>, vector<1x1x128xf32>
      tpu.vector_store %arg5[%c0_15, %c0_16, %c0_17], %23 {strides = array<i32>} : memref<1x1x128xf32, #tpu.memory_space<vmem>>, vector<1x1x128xf32>,
      %c0_18 = arith.constant 0 : index
      %c0_19 = arith.constant 0 : index
      %c0_20 = arith.constant 0 : index
      %25 = vector.load %arg6[%c0_18, %c0_19, %c0_20] : memref<1x1x128xf32, #tpu.memory_space<vmem>>, vector<1x1x128xf32>
      %26 = arith.extui %12 : vector<16x128xi1> to vector<16x128xi32>
      %27 = arith.sitofp %26 : vector<16x128xi32> to vector<16x128xf32>
      %cst_21 = arith.constant dense<0.000000e+00> : vector<128xf32>
      %28 = vector.multi_reduction <add>, %27, %cst_21 [0] : vector<16x128xf32> to vector<128xf32>
      %29 = vector.shape_cast %28 : vector<128xf32> to vector<1x128xf32>
      %30 = vector.shape_cast %29 : vector<1x128xf32> to vector<1x1x128xf32>
      %31 = arith.addf %25, %30 : vector<1x1x128xf32>
      %c0_22 = arith.constant 0 : index
      %c0_23 = arith.constant 0 : index
      %c0_24 = arith.constant 0 : index
      %32 = vector.load %arg6[%c0_22, %c0_23, %c0_24] : memref<1x1x128xf32, #tpu.memory_space<vmem>>, vector<1x1x128xf32>
      tpu.vector_store %arg6[%c0_22, %c0_23, %c0_24], %31 {strides = array<i32>} : memref<1x1x128xf32, #tpu.memory_space<vmem>>, vector<1x1x128xf32>,
    } else {
    }
    %c0_i32_3 = arith.constant 0 : i32
    %8 = arith.cmpi eq, %4, %c0_i32_3 : i32
    %9 = arith.extui %8 : i1 to i32
    %c0_i32_4 = arith.constant 0 : i32
    %10 = arith.cmpi ne, %9, %c0_i32_4 : i32
    scf.if %10 {
      %c16_i32 = arith.constant 16 : i32
      %11 = arith.muli %4, %c16_i32 : i32
      %12 = tpu.iota {dimensions = array<i32: 0>} : vector<16x128xi32>
      %13 = vector.broadcast %11 : i32 to vector<16x128xi32>
      %14 = arith.addi %13, %12 : vector<16x128xi32>
      %c0 = arith.constant 0 : index
      %c0_5 = arith.constant 0 : index
      %15 = vector.load %arg4[%c0, %c0_5] : memref<16x128xi32, #tpu.memory_space<vmem>>, vector<16x128xi32>
      %cst = arith.constant dense<0> : vector<16x128xi32>
      %16 = arith.cmpi ne, %15, %cst : vector<16x128xi32>
      %c16_i32_6 = arith.constant 16 : i32
      %17 = vector.broadcast %c16_i32_6 : i32 to vector<16x128xi32>
      %18 = arith.cmpi slt, %14, %17 : vector<16x128xi32>
      %19 = arith.andi %16, %18 : vector<16x128xi1>
      %c0_7 = arith.constant 0 : index
      %c0_8 = arith.constant 0 : index
      %20 = vector.load %arg2[%c0_7, %c0_8] : memref<16x128xf32, #tpu.memory_space<vmem>>, vector<16x128xf32>
      %c0_9 = arith.constant 0 : index
      %c0_10 = arith.constant 0 : index
      %21 = vector.load %arg3[%c0_9, %c0_10] : memref<16x128xf32, #tpu.memory_space<vmem>>, vector<16x128xf32>
      %22 = arith.subf %20, %21 : vector<16x128xf32>
      %cst_11 = arith.constant 0.000000e+00 : f32
      %23 = vector.broadcast %cst_11 : f32 to vector<16x128xf32>
      %24 = arith.select %19, %22, %23 : vector<16x128xi1>, vector<16x128xf32>
      %c0_12 = arith.constant 0 : index
      %c0_13 = arith.constant 0 : index
      %c0_14 = arith.constant 0 : index
      %25 = vector.load %arg5[%c0_12, %c0_13, %c0_14] : memref<1x1x128xf32, #tpu.memory_space<vmem>>, vector<1x1x128xf32>
      %26 = arith.mulf %24, %24 : vector<16x128xf32>
      %cst_15 = arith.constant dense<0.000000e+00> : vector<128xf32>
      %27 = vector.multi_reduction <add>, %26, %cst_15 [0] : vector<16x128xf32> to vector<128xf32>
      %28 = vector.shape_cast %27 : vector<128xf32> to vector<1x128xf32>
      %29 = vector.shape_cast %28 : vector<1x128xf32> to vector<1x1x128xf32>
      %30 = arith.addf %25, %29 : vector<1x1x128xf32>
      %c0_16 = arith.constant 0 : index
      %c0_17 = arith.constant 0 : index
      %c0_18 = arith.constant 0 : index
      %31 = vector.load %arg5[%c0_16, %c0_17, %c0_18] : memref<1x1x128xf32, #tpu.memory_space<vmem>>, vector<1x1x128xf32>
      tpu.vector_store %arg5[%c0_16, %c0_17, %c0_18], %30 {strides = array<i32>} : memref<1x1x128xf32, #tpu.memory_space<vmem>>, vector<1x1x128xf32>,
      %c0_19 = arith.constant 0 : index
      %c0_20 = arith.constant 0 : index
      %c0_21 = arith.constant 0 : index
      %32 = vector.load %arg6[%c0_19, %c0_20, %c0_21] : memref<1x1x128xf32, #tpu.memory_space<vmem>>, vector<1x1x128xf32>
      %33 = arith.extui %19 : vector<16x128xi1> to vector<16x128xi32>
      %34 = arith.sitofp %33 : vector<16x128xi32> to vector<16x128xf32>
      %cst_22 = arith.constant dense<0.000000e+00> : vector<128xf32>
      %35 = vector.multi_reduction <add>, %34, %cst_22 [0] : vector<16x128xf32> to vector<128xf32>
      %36 = vector.shape_cast %35 : vector<128xf32> to vector<1x128xf32>
      %37 = vector.shape_cast %36 : vector<1x128xf32> to vector<1x1x128xf32>
      %38 = arith.addf %32, %37 : vector<1x1x128xf32>
      %c0_23 = arith.constant 0 : index
      %c0_24 = arith.constant 0 : index
      %c0_25 = arith.constant 0 : index
      %39 = vector.load %arg6[%c0_23, %c0_24, %c0_25] : memref<1x1x128xf32, #tpu.memory_space<vmem>>, vector<1x1x128xf32>
      tpu.vector_store %arg6[%c0_23, %c0_24, %c0_25], %38 {strides = array<i32>} : memref<1x1x128xf32, #tpu.memory_space<vmem>>, vector<1x1x128xf32>,
    } else {
    }
    return
  }
  func.func @transform_0(%arg0: i32, %arg1: i32) -> (i32, i32) {
    %c1_i32 = arith.constant 1 : i32
    %0 = arith.muli %arg0, %c1_i32 : i32
    %1 = arith.addi %0, %arg1 : i32
    %c0_i32 = arith.constant 0 : i32
    %2 = arith.minsi %1, %c0_i32 : i32
    %c0_i32_0 = arith.constant 0 : i32
    %c0_i32_1 = arith.constant 0 : i32
    return %2, %c0_i32_0 : i32, i32
  }
  func.func @transform_1(%arg0: i32, %arg1: i32) -> (i32, i32) {
    %c1_i32 = arith.constant 1 : i32
    %0 = arith.muli %arg0, %c1_i32 : i32
    %1 = arith.addi %0, %arg1 : i32
    %c0_i32 = arith.constant 0 : i32
    %2 = arith.minsi %1, %c0_i32 : i32
    %c0_i32_0 = arith.constant 0 : i32
    %c0_i32_1 = arith.constant 0 : i32
    return %2, %c0_i32_0 : i32, i32
  }
  func.func @transform_2(%arg0: i32, %arg1: i32) -> (i32, i32) {
    %c1_i32 = arith.constant 1 : i32
    %0 = arith.muli %arg0, %c1_i32 : i32
    %1 = arith.addi %0, %arg1 : i32
    %c0_i32 = arith.constant 0 : i32
    %2 = arith.minsi %1, %c0_i32 : i32
    %c0_i32_0 = arith.constant 0 : i32
    %c0_i32_1 = arith.constant 0 : i32
    return %2, %c0_i32_0 : i32, i32
  }
  func.func @transform_3(%arg0: i32, %arg1: i32) -> (i32, i32, i32) {
    %c0_i32 = arith.constant 0 : i32
    %c0_i32_0 = arith.constant 0 : i32
    %c0_i32_1 = arith.constant 0 : i32
    return %arg0, %c0_i32, %c0_i32_0 : i32, i32, i32
  }
  func.func @transform_4(%arg0: i32, %arg1: i32) -> (i32, i32, i32) {
    %c0_i32 = arith.constant 0 : i32
    %c0_i32_0 = arith.constant 0 : i32
    %c0_i32_1 = arith.constant 0 : i32
    return %arg0, %c0_i32, %c0_i32_0 : i32, i32, i32
  }
}

</mosaic_0001>

<llo_original>
// kernel: masked_mse_loss.1
$region0: #{masked_mse_loss.1}
  #allocation0 [shape = 'u32[]', space=smem, size = 0x4, offset = 0x4, fixed_abs, tag = 'smem constant byte address 0x4 - core index']
  #allocation1 [shape = 'u32[72,128]{1,0:T(1,128)}', space=vmem, size = 0x9000, scoped, tag = 'internal scratch']
  %s0 = inlined_call_operand.vmem [shape: f32[16,128], index: 0, kind: input, shape index: {}]
  %s1 = inlined_call_operand.vmem [shape: f32[16,128], index: 1, kind: input, shape index: {}]
  %s2 = inlined_call_operand.vmem [shape: s32[16,128], index: 2, kind: input, shape index: {}]
  %s3 = inlined_call_operand.vmem [shape: f32[1,1,128], index: 3, kind: output, shape index: {0}]
  %s4 = inlined_call_operand.vmem [shape: f32[1,1,128], index: 4, kind: output, shape index: {1}]
  %5 = xla_tuple %s3, %s4
  %s6 = sld [smem:[#allocation0]]
  $region42: #{masked_mse_loss.1} parent=0
    _
  %s8 = ssub.s32 1, %s6
  %s9 = scalar_select 0, %s8, %s6
  // Predicated region
  $region2: #{masked_mse_loss.1} parent=0 // pred_check
    _
  $region3: #{masked_mse_loss.1} parent=0 // pred_check_branch
    %11 = sbr.rel (0) target = $region5
  $region4: #{masked_mse_loss.1} parent=0 // pred_region
    %s12 = sadd.s32 0, 0
    %p13 = scmp.lt.s32.totalorder %s12, 0
    %s14 = scalar_select %p13, %s12, 0
    %s15 = smul.u32 2, %s14
    %p16 = scmp.lt.s32.totalorder %s15, 1
    %s17 = scalar_select %p16, %s15, 1
    %s18 = smul.addr %s17, 8
    %s19 = scalar_lea.vmem %s0, %s18
    %s20 = sadd.s32 0, 0
    %p21 = scmp.lt.s32.totalorder %s20, 0
    %s22 = scalar_select %p21, %s20, 0
    %s23 = smul.u32 2, %s22
  $region5: #{masked_mse_loss.1} parent=0 // pred_fallthru
    _
  // Predicated region
  $region6: #{masked_mse_loss.1} parent=0 // pred_check
    _
  $region7: #{masked_mse_loss.1} parent=0 // pred_check_branch
    %25 = sbr.rel (0) target = $region9
  $region8: #{masked_mse_loss.1} parent=0 // pred_region
    %s26 = sadd.s32 0, 0
    %p27 = scmp.lt.s32.totalorder %s26, 0
    %s28 = scalar_select %p27, %s26, 0
    %s29 = smul.u32 2, %s28
    %p30 = scmp.lt.s32.totalorder %s29, 1
    %s31 = scalar_select %p30, %s29, 1
    %s32 = smul.addr %s31, 8
    %s33 = scalar_lea.vmem %s1, %s32
    %s34 = sadd.s32 0, 0
    %p35 = scmp.lt.s32.totalorder %s34, 0
    %s36 = scalar_select %p35, %s34, 0
    %s37 = smul.u32 2, %s36
  $region9: #{masked_mse_loss.1} parent=0 // pred_fallthru
    _
  // Predicated region
  $region10: #{masked_mse_loss.1} parent=0 // pred_check
    _
  $region11: #{masked_mse_loss.1} parent=0 // pred_check_branch
    %39 = sbr.rel (0) target = $region13
  $region12: #{masked_mse_loss.1} parent=0 // pred_region
    %s40 = sadd.s32 0, 0
    %p41 = scmp.lt.s32.totalorder %s40, 0
    %s42 = scalar_select %p41, %s40, 0
    %s43 = smul.u32 2, %s42
    %p44 = scmp.lt.s32.totalorder %s43, 1
    %s45 = scalar_select %p44, %s43, 1
    %s46 = smul.addr %s45, 8
    %s47 = scalar_lea.vmem %s2, %s46
    %s48 = sadd.s32 0, 0
    %p49 = scmp.lt.s32.totalorder %s48, 0
    %s50 = scalar_select %p49, %s48, 0
    %s51 = smul.u32 2, %s50
  $region13: #{masked_mse_loss.1} parent=0 // pred_fallthru
    _
  %s52 = sadd.s32 0, 0
  %p53 = scmp.lt.s32.totalorder %s52, 0
  %s54 = scalar_select %p53, %s52, 0
  %s55 = smul.u32 2, %s54
  %p56 = scmp.lt.s32.totalorder %s55, 1
  %s57 = scalar_select %p56, %s55, 1
  %s58 = smul.addr %s57, 8
  %s59 = scalar_lea.vmem %s0, %s58
  %s60 = sadd.s32 0, 0
  %p61 = scmp.lt.s32.totalorder %s60, 0
  %s62 = scalar_select %p61, %s60, 0
  %s63 = smul.u32 2, %s62
  %p64 = scmp.lt.s32.totalorder %s63, 1
  %s65 = scalar_select %p64, %s63, 1
  %s66 = smul.addr %s65, 8
  %s67 = scalar_lea.vmem %s1, %s66
  %s68 = sadd.s32 0, 0
  %p69 = scmp.lt.s32.totalorder %s68, 0
  %s70 = scalar_select %p69, %s68, 0
  %s71 = smul.u32 2, %s70
  %p72 = scmp.lt.s32.totalorder %s71, 1
  %s73 = scalar_select %p72, %s71, 1
  %s74 = smul.addr %s73, 8
  %s75 = scalar_lea.vmem %s2, %s74
  %s76 = sadd.s32 0, 0
  %p77 = scmp.lt.s32.totalorder %s76, 0
  %s78 = scalar_select %p77, %s76, 0
  %s79 = smul.u32 2, %s78
  %p80 = scmp.lt.s32.totalorder %s79, 1
  %s81 = scalar_select %p80, %s79, 1
  %s82 = smul.addr %s81, 8
  %s83 = scalar_lea.vmem %s0, %s82
  %s84 = sadd.s32 0, 0
  %p85 = scmp.lt.s32.totalorder %s84, 0
  %s86 = scalar_select %p85, %s84, 0
  %s87 = smul.u32 2, %s86
  %s88 = sadd.s32 0, 0
  %p89 = scmp.lt.s32.totalorder %s88, 0
  %s90 = scalar_select %p89, %s88, 0
  %s91 = smul.u32 2, %s90
  %p92 = scmp.lt.s32.totalorder %s91, 1
  %s93 = scalar_select %p92, %s91, 1
  %s94 = smul.addr %s93, 8
  %s95 = scalar_lea.vmem %s1, %s94
  %s96 = sadd.s32 0, 0
  %p97 = scmp.lt.s32.totalorder %s96, 0
  %s98 = scalar_select %p97, %s96, 0
  %s99 = smul.u32 2, %s98
  %s100 = sadd.s32 0, 0
  %p101 = scmp.lt.s32.totalorder %s100, 0
  %s102 = scalar_select %p101, %s100, 0
  %s103 = smul.u32 2, %s102
  %p104 = scmp.lt.s32.totalorder %s103, 1
  %s105 = scalar_select %p104, %s103, 1
  %s106 = smul.addr %s105, 8
  %s107 = scalar_lea.vmem %s2, %s106
  %s108 = sadd.s32 0, 0
  %p109 = scmp.lt.s32.totalorder %s108, 0
  %s110 = scalar_select %p109, %s108, 0
  %s111 = smul.u32 2, %s110
  %p112 = scmp.eq.s32.totalorder 0, 0
  // Predicated region
  $region14: #{masked_mse_loss.1} parent=0 // pred_check
    %p113 = pneg %p112
  $region15: #{masked_mse_loss.1} parent=0 // pred_check_branch
    %115 = sbr.rel (%p113) target = $region17
  $region16: #{masked_mse_loss.1} parent=0 // pred_region
    %116 = vst [vmem:[%s3] sm:$0x1] 0.0
    %117 = vst [vmem:[%s4] sm:$0x1] 0.0
  $region17: #{masked_mse_loss.1} parent=0 // pred_fallthru
    _
  %s118 = sadd.s32 0, 0
  %p119 = scmp.lt.s32.totalorder %s118, 0
  // Predicated region
  $region18: #{masked_mse_loss.1} parent=0 // pred_check
    %p120 = pneg %p119
  $region19: #{masked_mse_loss.1} parent=0 // pred_check_branch
    %122 = sbr.rel (%p120) target = $region21
  $region20: #{masked_mse_loss.1} parent=0 // pred_region
    %v123 = vld [vmem:[%s107] sm:$0xff]
    %v124 = vld [vmem:[%s107 + $0x8] sm:$0xff]
    %vm125 = vcmp.ne.s32.totalorder %v123, 0
    %vm126 = vcmp.ne.s32.totalorder %v124, 0
    %v127 = vld [vmem:[%s83] sm:$0xff]
    %v128 = vld [vmem:[%s83 + $0x8] sm:$0xff]
    %v129 = vld [vmem:[%s95] sm:$0xff]
    %v130 = vld [vmem:[%s95 + $0x8] sm:$0xff]
    %v131 = vsub.f32 %v127, %v129
    %v132 = vsub.f32 %v128, %v130
    %v133 = vsel %vm125, %v131, 0.0
    %v134 = vsel %vm126, %v132, 0.0
    %v135 = vld [vmem:[%s3] sm:$0x1]
    %v136 = vmul.f32 %v133, %v133
    %v137 = vmul.f32 %v134, %v134
    %v138 = vadd.f32 %v136, %v137
    %v139 = vrot.slane %v138, 4
    %v140 = vadd.f32 %v138, %v139
    %v141 = vrot.slane %v140, 2
    %v142 = vadd.f32 %v140, %v141
    %v143 = vrot.slane %v142, 1
    %v144 = vadd.f32 %v142, %v143
    %v145 = vadd.f32 %v135, %v144
    %146 = vst [vmem:[%s3] sm:$0x1] %v145
    %v147 = vld [vmem:[%s4] sm:$0x1]
    %v148 = vsel %vm125, 1, 0
    %v149 = vsel %vm126, 1, 0
    %v150 = vcvt.s32.f32 %v148
    %v151 = vcvt.s32.f32 %v149
    %v152 = vadd.f32 %v150, %v151
    %v153 = vrot.slane %v152, 4
    %v154 = vadd.f32 %v152, %v153
    %v155 = vrot.slane %v154, 2
    %v156 = vadd.f32 %v154, %v155
    %v157 = vrot.slane %v156, 1
    %v158 = vadd.f32 %v156, %v157
    %v159 = vadd.f32 %v147, %v158
    %160 = vst [vmem:[%s4] sm:$0x1] %v159
  $region21: #{masked_mse_loss.1} parent=0 // pred_fallthru
    _
  %p161 = scmp.eq.s32.totalorder %s118, 0
  // Predicated region
  $region22: #{masked_mse_loss.1} parent=0 // pred_check
    %p162 = pneg %p161
  $region23: #{masked_mse_loss.1} parent=0 // pred_check_branch
    %164 = sbr.rel (%p162) target = $region25
  $region24: #{masked_mse_loss.1} parent=0 // pred_region
    %s165 = smul.u32 %s118, 16
    %v166 = vlaneseq
    %v167 = vshrl.u32 %v166, 7
    %v168 = vadd.s32 %v167, 8
    %v169 = vstv %s165
    %v170 = vadd.s32 %v169, %v167
    %v171 = vadd.s32 %v169, %v168
    %v172 = vld [vmem:[%s107] sm:$0xff]
    %v173 = vld [vmem:[%s107 + $0x8] sm:$0xff]
    %vm174 = vcmp.ne.s32.totalorder %v172, 0
    %vm175 = vcmp.ne.s32.totalorder %v173, 0
    %vm176 = vcmp.lt.s32.totalorder %v170, 16
    %vm177 = vcmp.lt.s32.totalorder %v171, 16
    %vm178 = vmand %vm174, %vm176
    %vm179 = vmand %vm175, %vm177
    %v180 = vld [vmem:[%s83] sm:$0xff]
    %v181 = vld [vmem:[%s83 + $0x8] sm:$0xff]
    %v182 = vld [vmem:[%s95] sm:$0xff]
    %v183 = vld [vmem:[%s95 + $0x8] sm:$0xff]
    %v184 = vsub.f32 %v180, %v182
    %v185 = vsub.f32 %v181, %v183
    %v186 = vsel %vm178, %v184, 0.0
    %v187 = vsel %vm179, %v185, 0.0
    %v188 = vld [vmem:[%s3] sm:$0x1]
    %v189 = vmul.f32 %v186, %v186
    %v190 = vmul.f32 %v187, %v187
    %v191 = vadd.f32 %v189, %v190
    %v192 = vrot.slane %v191, 4
    %v193 = vadd.f32 %v191, %v192
    %v194 = vrot.slane %v193, 2
    %v195 = vadd.f32 %v193, %v194
    %v196 = vrot.slane %v195, 1
    %v197 = vadd.f32 %v195, %v196
    %v198 = vadd.f32 %v188, %v197
    %199 = vst [vmem:[%s3] sm:$0x1] %v198
    %v200 = vld [vmem:[%s4] sm:$0x1]
    %v201 = vsel %vm178, 1, 0
    %v202 = vsel %vm179, 1, 0
    %v203 = vcvt.s32.f32 %v201
    %v204 = vcvt.s32.f32 %v202
    %v205 = vadd.f32 %v203, %v204
    %v206 = vrot.slane %v205, 4
    %v207 = vadd.f32 %v205, %v206
    %v208 = vrot.slane %v207, 2
    %v209 = vadd.f32 %v207, %v208
    %v210 = vrot.slane %v209, 1
    %v211 = vadd.f32 %v209, %v210
    %v212 = vadd.f32 %v200, %v211
    %213 = vst [vmem:[%s4] sm:$0x1] %v212
  $region25: #{masked_mse_loss.1} parent=0 // pred_fallthru
    _
  // Predicated region
  $region26: #{masked_mse_loss.1} parent=0 // pred_check
    _
  $region27: #{masked_mse_loss.1} parent=0 // pred_check_branch
    %215 = sbr.rel (0) target = $region29
  $region28: #{masked_mse_loss.1} parent=0 // pred_region
    _
  $region29: #{masked_mse_loss.1} parent=0 // pred_fallthru
    _
  // Predicated region
  $region30: #{masked_mse_loss.1} parent=0 // pred_check
    _
  $region31: #{masked_mse_loss.1} parent=0 // pred_check_branch
    %217 = sbr.rel (0) target = $region33
  $region32: #{masked_mse_loss.1} parent=0 // pred_region
    _
  $region33: #{masked_mse_loss.1} parent=0 // pred_fallthru
    _
  // Predicated region
  $region34: #{masked_mse_loss.1} parent=0 // pred_check
    _
  $region35: #{masked_mse_loss.1} parent=0 // pred_check_branch
    %219 = sbr.rel (0) target = $region37
  $region36: #{masked_mse_loss.1} parent=0 // pred_region
    _
  $region37: #{masked_mse_loss.1} parent=0 // pred_fallthru
    _
  // Predicated region
  $region38: #{masked_mse_loss.1} parent=0 // pred_check
    _
  $region39: #{masked_mse_loss.1} parent=0 // pred_check_branch
    %221 = sbr.rel (0) target = $region41
  $region40: #{masked_mse_loss.1} parent=0 // pred_region
    _
  $region41: #{masked_mse_loss.1} parent=0 // pred_fallthru
    _

</llo_original>
